<compile_context>
chip_gen: v5e
topology: v5e:2x2
jax: 0.10.0
libtpu: 0.0.40
codegen_flags: <defaults>
</compile_context>

<pallas_src>
import jax
import jax.numpy as jnp
from jax.experimental import pallas as pl
from jax.experimental.pallas import tpu as pltpu


def _lstm_branch_kernel(x_ref, w_lstm_ref, fc_ref, out_ref):
    B, S, I = x_ref.shape
    H4 = w_lstm_ref.shape[1]
    H = H4 // 4

    # One packed operand -> one prologue DMA for all LSTM parameters.
    # Row slices start at sublane-aligned offsets (I=16, I+H=48).
    w_all = w_lstm_ref[...]                     # (I + H + 1, 4H), loaded once
    w_ih = w_all[0:I, :]                        # (I, 4H)  (i/f/o columns pre-scaled by 0.5)
    w_hh = w_all[I:I + H, :]                    # (H, 4H)
    b = w_all[I + H:I + H + 1, :]               # (1, 4H)

    # ---- Hoisted input projection: one matmul instead of S tiny ones. ----
    x2d = x_ref[...].reshape(B * S, I)          # trivial relayout (S % 8 == 0)
    xw = jnp.dot(x2d, w_ih, preferred_element_type=jnp.float32) + b
    xw = xw.reshape(B, S, H4)                   # (B, S, 4H); per-t slices are off
                                                # the serial h/c dependency chain

    # ---- Time recurrence (true serial dependence), fully unrolled (S=8). ----
    h = jnp.zeros((B, H), jnp.float32)
    c = jnp.zeros((B, H), jnp.float32)
    for t in range(S):
        gates = xw[:, t, :] + jnp.dot(h, w_hh, preferred_element_type=jnp.float32)
        tg = jnp.tanh(gates)                    # ONE EUP pass covers i, f, g, o
        i_g = tg[:, 0 * H:1 * H] * 0.5 + 0.5    # == sigmoid(raw_i)   (scale folded
        f_g = tg[:, 1 * H:2 * H] * 0.5 + 0.5    # == sigmoid(raw_f)    into weights)
        g_g = tg[:, 2 * H:3 * H]                # == tanh(raw_g)
        o_g = tg[:, 3 * H:4 * H] * 0.5 + 0.5    # == sigmoid(raw_o)
        c = f_g * c + i_g * g_g
        h = o_g * jnp.tanh(c)                   # 2nd (and last) EUP push this step

    # ---- Final Linear on the last hidden state (packed weight+bias). ----
    fc_all = fc_ref[...]                        # (H + 1, O)
    w_fc = fc_all[0:H, :]
    b_fc = fc_all[H:H + 1, :]
    out_ref[...] = (jnp.dot(h, w_fc, preferred_element_type=jnp.float32)
                    + b_fc).astype(out_ref.dtype)


def lstm_branch_forward(x, packed_params):
    """x: (batch, seq, input_size) f32.  Returns (batch, output_features) f32."""
    w_lstm_packed, fc_packed = packed_params
    B, S, I = x.shape
    H = (w_lstm_packed.shape[0] - I - 1)
    O = fc_packed.shape[1]
    assert w_lstm_packed.shape == (I + H + 1, 4 * H)
    if S == 0:
        raise ValueError("LSTMBranch requires seq_len >= 1")

    # Single invocation; every operand is a whole-array VMEM block (loaded once,
    # no pipelining / double-buffering).  Only 3 input DMA descriptors.
    return pl.pallas_call(
        _lstm_branch_kernel,
        out_shape=jax.ShapeDtypeStruct((B, O), jnp.float32),
        in_specs=[pl.BlockSpec(memory_space=pltpu.MemorySpace.VMEM)] * 3,
        out_specs=pl.BlockSpec(memory_space=pltpu.MemorySpace.VMEM),
    )(x, w_lstm_packed, fc_packed)


def init_torch_params(key, input_size, hidden_size, output_features):
    """PyTorch-layout params, uniform(-1/sqrt(H), 1/sqrt(H)) like nn.LSTM/nn.Linear."""
    ks = jax.random.split(key, 6)
    bound = 1.0 / jnp.sqrt(hidden_size)
    w_ih = jax.random.uniform(ks[0], (4 * hidden_size, input_size), jnp.float32, -bound, bound)
    w_hh = jax.random.uniform(ks[1], (4 * hidden_size, hidden_size), jnp.float32, -bound, bound)
    b_ih = jax.random.uniform(ks[2], (4 * hidden_size,), jnp.float32, -bound, bound)
    b_hh = jax.random.uniform(ks[3], (4 * hidden_size,), jnp.float32, -bound, bound)
    w_fc = jax.random.uniform(ks[4], (output_features, hidden_size), jnp.float32, -bound, bound)
    b_fc = jax.random.uniform(ks[5], (output_features,), jnp.float32, -bound, bound)
    return w_ih, w_hh, b_ih, b_hh, w_fc, b_fc


def pack_params(torch_params):
    """Pack PyTorch-layout params into the kernel's 2-operand layout.

    * transpose to activation @ weight form,
    * fold b_ih + b_hh into one bias row,
    * pre-scale the i/f/o gate column blocks (PyTorch order [i,f,g,o]) by 0.5 so
      the kernel can use a single tanh for all gates (sigmoid(z)=0.5*tanh(z/2)+0.5),
    * concatenate [w_ih; w_hh; b] -> (I+H+1, 4H) and [w_fc; b_fc] -> (H+1, O).
    """
    w_ih, w_hh, b_ih, b_hh, w_fc, b_fc = torch_params
    H = w_hh.shape[1]
    I = w_ih.shape[1]
    O = w_fc.shape[0]

    # Per-gate scale: 0.5 for i, f, o (sigmoid-via-tanh), 1.0 for g (plain tanh).
    gate_scale = jnp.concatenate([
        jnp.full((H,), 0.5, jnp.float32),   # i
        jnp.full((H,), 0.5, jnp.float32),   # f
        jnp.full((H,), 1.0, jnp.float32),   # g
        jnp.full((H,), 0.5, jnp.float32),   # o
    ])                                       # (4H,)

    w_ih_t = w_ih.T * gate_scale[None, :]                       # (I, 4H)
    w_hh_t = w_hh.T * gate_scale[None, :]                       # (H, 4H)
    b = ((b_ih + b_hh) * gate_scale).reshape(1, 4 * H)          # (1, 4H)
    w_lstm_packed = jnp.concatenate([w_ih_t, w_hh_t, b], axis=0)  # (I+H+1, 4H)

    fc_packed = jnp.concatenate([w_fc.T, b_fc.reshape(1, O)], axis=0)  # (H+1, O)
    return w_lstm_packed, fc_packed


def reference_forward(x, torch_params):
    """Pure-JAX reference matching PyTorch LSTM(batch_first) + Linear semantics."""
    w_ih, w_hh, b_ih, b_hh, w_fc, b_fc = torch_params
    B, S, I = x.shape
    H = w_hh.shape[1]
    b = b_ih + b_hh
    h = jnp.zeros((B, H), jnp.float32)
    c = jnp.zeros((B, H), jnp.float32)

    def step(carry, x_t):
        h, c = carry
        gates = x_t @ w_ih.T + h @ w_hh.T + b
        i_g = jax.nn.sigmoid(gates[:, 0 * H:1 * H])
        f_g = jax.nn.sigmoid(gates[:, 1 * H:2 * H])
        g_g = jnp.tanh(gates[:, 2 * H:3 * H])
        o_g = jax.nn.sigmoid(gates[:, 3 * H:4 * H])
        c = f_g * c + i_g * g_g
        h = o_g * jnp.tanh(c)
        return (h, c), None

    (h, c), _ = jax.lax.scan(step, (h, c), jnp.transpose(x, (1, 0, 2)))
    return h @ w_fc.T + b_fc


if __name__ == "__main__":
    batch, seq, input_size = 2, 8, 16
    hidden_size, output_features = 32, 8

    key = jax.random.PRNGKey(0)
    k_x, k_p = jax.random.split(key)
    x = jax.random.normal(k_x, (batch, seq, input_size), jnp.float32)
    torch_params = init_torch_params(k_p, input_size, hidden_size, output_features)
    packed = pack_params(torch_params)

    out = jax.block_until_ready(lstm_branch_forward(x, packed))
    ref = jax.block_until_ready(reference_forward(x, torch_params))

    assert out.shape == (batch, output_features)
    assert jnp.allclose(out, ref, rtol=1e-4, atol=1e-4), "mismatch vs reference"

    print("KERNEL_OK")
</pallas_src>

<mosaic_0001>
module attributes {stable_mosaic.version = 11 : i64} {
  func.func @_lstm_branch_kernel(%arg0: memref<2x8x16xf32, #tpu.memory_space<vmem>>, %arg1: memref<49x128xf32, #tpu.memory_space<vmem>>, %arg2: memref<33x8xf32, #tpu.memory_space<vmem>>, %arg3: memref<2x8xf32, #tpu.memory_space<vmem>>) attributes {dimension_semantics = [], scalar_prefetch = 0 : i64, scratch_operands = 0 : i64, tpu.core_type = #tpu.core_type<tc>} {
    %c0 = arith.constant 0 : index
    %c0_0 = arith.constant 0 : index
    %0 = vector.load %arg1[%c0, %c0_0] : memref<49x128xf32, #tpu.memory_space<vmem>>, vector<49x128xf32>
    %1 = vector.extract_strided_slice %0 {offsets = [0, 0], sizes = [16, 128], strides = [1, 1]} : vector<49x128xf32> to vector<16x128xf32>
    %2 = vector.extract_strided_slice %0 {offsets = [16, 0], sizes = [32, 128], strides = [1, 1]} : vector<49x128xf32> to vector<32x128xf32>
    %3 = vector.extract_strided_slice %0 {offsets = [48, 0], sizes = [1, 128], strides = [1, 1]} : vector<49x128xf32> to vector<1x128xf32>
    %c0_1 = arith.constant 0 : index
    %c0_2 = arith.constant 0 : index
    %c0_3 = arith.constant 0 : index
    %4 = vector.load %arg0[%c0_1, %c0_2, %c0_3] : memref<2x8x16xf32, #tpu.memory_space<vmem>>, vector<2x8x16xf32>
    %5 = vector.shape_cast %4 : vector<2x8x16xf32> to vector<16x16xf32>
    %cst = arith.constant dense<0.000000e+00> : vector<16x128xf32>
    %6 = tpu.matmul %5, %1, %cst {dimension_numbers = #tpu.dot_dimension_numbers<[1], [0], [0], [1], [0, 0, 1, 1], [], []>} : vector<16x16xf32>, vector<16x128xf32>, vector<16x128xf32> -> vector<16x128xf32>
    %7 = vector.broadcast %3 : vector<1x128xf32> to vector<16x128xf32>
    %8 = arith.addf %6, %7 : vector<16x128xf32>
    %9 = vector.shape_cast %8 : vector<16x128xf32> to vector<2x8x128xf32>
    %cst_4 = arith.constant 0.000000e+00 : f32
    %10 = vector.broadcast %cst_4 : f32 to vector<2x32xf32>
    %cst_5 = arith.constant 0.000000e+00 : f32
    %11 = vector.broadcast %cst_5 : f32 to vector<2x32xf32>
    %12 = vector.extract_strided_slice %9 {offsets = [0, 0, 0], sizes = [2, 1, 128], strides = [1, 1, 1]} : vector<2x8x128xf32> to vector<2x1x128xf32>
    %13 = vector.shape_cast %12 : vector<2x1x128xf32> to vector<2x128xf32>
    %cst_6 = arith.constant dense<0.000000e+00> : vector<2x128xf32>
    %14 = tpu.matmul %10, %2, %cst_6 {dimension_numbers = #tpu.dot_dimension_numbers<[1], [0], [0], [1], [0, 0, 1, 1], [], []>} : vector<2x32xf32>, vector<32x128xf32>, vector<2x128xf32> -> vector<2x128xf32>
    %15 = arith.addf %13, %14 : vector<2x128xf32>
    %16 = math.tanh %15 : vector<2x128xf32>
    %17 = vector.extract_strided_slice %16 {offsets = [0, 0], sizes = [2, 32], strides = [1, 1]} : vector<2x128xf32> to vector<2x32xf32>
    %cst_7 = arith.constant 5.000000e-01 : f32
    %18 = vector.broadcast %cst_7 : f32 to vector<2x32xf32>
    %19 = arith.mulf %17, %18 : vector<2x32xf32>
    %cst_8 = arith.constant 5.000000e-01 : f32
    %20 = vector.broadcast %cst_8 : f32 to vector<2x32xf32>
    %21 = arith.addf %19, %20 : vector<2x32xf32>
    %22 = vector.extract_strided_slice %16 {offsets = [0, 32], sizes = [2, 32], strides = [1, 1]} : vector<2x128xf32> to vector<2x32xf32>
    %cst_9 = arith.constant 5.000000e-01 : f32
    %23 = vector.broadcast %cst_9 : f32 to vector<2x32xf32>
    %24 = arith.mulf %22, %23 : vector<2x32xf32>
    %cst_10 = arith.constant 5.000000e-01 : f32
    %25 = vector.broadcast %cst_10 : f32 to vector<2x32xf32>
    %26 = arith.addf %24, %25 : vector<2x32xf32>
    %27 = vector.extract_strided_slice %16 {offsets = [0, 64], sizes = [2, 32], strides = [1, 1]} : vector<2x128xf32> to vector<2x32xf32>
    %28 = vector.extract_strided_slice %16 {offsets = [0, 96], sizes = [2, 32], strides = [1, 1]} : vector<2x128xf32> to vector<2x32xf32>
    %cst_11 = arith.constant 5.000000e-01 : f32
    %29 = vector.broadcast %cst_11 : f32 to vector<2x32xf32>
    %30 = arith.mulf %28, %29 : vector<2x32xf32>
    %cst_12 = arith.constant 5.000000e-01 : f32
    %31 = vector.broadcast %cst_12 : f32 to vector<2x32xf32>
    %32 = arith.addf %30, %31 : vector<2x32xf32>
    %33 = arith.mulf %26, %11 : vector<2x32xf32>
    %34 = arith.mulf %21, %27 : vector<2x32xf32>
    %35 = arith.addf %33, %34 : vector<2x32xf32>
    %36 = math.tanh %35 : vector<2x32xf32>
    %37 = arith.mulf %32, %36 : vector<2x32xf32>
    %38 = vector.extract_strided_slice %9 {offsets = [0, 1, 0], sizes = [2, 1, 128], strides = [1, 1, 1]} : vector<2x8x128xf32> to vector<2x1x128xf32>
    %39 = vector.shape_cast %38 : vector<2x1x128xf32> to vector<2x128xf32>
    %cst_13 = arith.constant dense<0.000000e+00> : vector<2x128xf32>
    %40 = tpu.matmul %37, %2, %cst_13 {dimension_numbers = #tpu.dot_dimension_numbers<[1], [0], [0], [1], [0, 0, 1, 1], [], []>} : vector<2x32xf32>, vector<32x128xf32>, vector<2x128xf32> -> vector<2x128xf32>
    %41 = arith.addf %39, %40 : vector<2x128xf32>
    %42 = math.tanh %41 : vector<2x128xf32>
    %43 = vector.extract_strided_slice %42 {offsets = [0, 0], sizes = [2, 32], strides = [1, 1]} : vector<2x128xf32> to vector<2x32xf32>
    %cst_14 = arith.constant 5.000000e-01 : f32
    %44 = vector.broadcast %cst_14 : f32 to vector<2x32xf32>
    %45 = arith.mulf %43, %44 : vector<2x32xf32>
    %cst_15 = arith.constant 5.000000e-01 : f32
    %46 = vector.broadcast %cst_15 : f32 to vector<2x32xf32>
    %47 = arith.addf %45, %46 : vector<2x32xf32>
    %48 = vector.extract_strided_slice %42 {offsets = [0, 32], sizes = [2, 32], strides = [1, 1]} : vector<2x128xf32> to vector<2x32xf32>
    %cst_16 = arith.constant 5.000000e-01 : f32
    %49 = vector.broadcast %cst_16 : f32 to vector<2x32xf32>
    %50 = arith.mulf %48, %49 : vector<2x32xf32>
    %cst_17 = arith.constant 5.000000e-01 : f32
    %51 = vector.broadcast %cst_17 : f32 to vector<2x32xf32>
    %52 = arith.addf %50, %51 : vector<2x32xf32>
    %53 = vector.extract_strided_slice %42 {offsets = [0, 64], sizes = [2, 32], strides = [1, 1]} : vector<2x128xf32> to vector<2x32xf32>
    %54 = vector.extract_strided_slice %42 {offsets = [0, 96], sizes = [2, 32], strides = [1, 1]} : vector<2x128xf32> to vector<2x32xf32>
    %cst_18 = arith.constant 5.000000e-01 : f32
    %55 = vector.broadcast %cst_18 : f32 to vector<2x32xf32>
    %56 = arith.mulf %54, %55 : vector<2x32xf32>
    %cst_19 = arith.constant 5.000000e-01 : f32
    %57 = vector.broadcast %cst_19 : f32 to vector<2x32xf32>
    %58 = arith.addf %56, %57 : vector<2x32xf32>
    %59 = arith.mulf %52, %35 : vector<2x32xf32>
    %60 = arith.mulf %47, %53 : vector<2x32xf32>
    %61 = arith.addf %59, %60 : vector<2x32xf32>
    %62 = math.tanh %61 : vector<2x32xf32>
    %63 = arith.mulf %58, %62 : vector<2x32xf32>
    %64 = vector.extract_strided_slice %9 {offsets = [0, 2, 0], sizes = [2, 1, 128], strides = [1, 1, 1]} : vector<2x8x128xf32> to vector<2x1x128xf32>
    %65 = vector.shape_cast %64 : vector<2x1x128xf32> to vector<2x128xf32>
    %cst_20 = arith.constant dense<0.000000e+00> : vector<2x128xf32>
    %66 = tpu.matmul %63, %2, %cst_20 {dimension_numbers = #tpu.dot_dimension_numbers<[1], [0], [0], [1], [0, 0, 1, 1], [], []>} : vector<2x32xf32>, vector<32x128xf32>, vector<2x128xf32> -> vector<2x128xf32>
    %67 = arith.addf %65, %66 : vector<2x128xf32>
    %68 = math.tanh %67 : vector<2x128xf32>
    %69 = vector.extract_strided_slice %68 {offsets = [0, 0], sizes = [2, 32], strides = [1, 1]} : vector<2x128xf32> to vector<2x32xf32>
    %cst_21 = arith.constant 5.000000e-01 : f32
    %70 = vector.broadcast %cst_21 : f32 to vector<2x32xf32>
    %71 = arith.mulf %69, %70 : vector<2x32xf32>
    %cst_22 = arith.constant 5.000000e-01 : f32
    %72 = vector.broadcast %cst_22 : f32 to vector<2x32xf32>
    %73 = arith.addf %71, %72 : vector<2x32xf32>
    %74 = vector.extract_strided_slice %68 {offsets = [0, 32], sizes = [2, 32], strides = [1, 1]} : vector<2x128xf32> to vector<2x32xf32>
    %cst_23 = arith.constant 5.000000e-01 : f32
    %75 = vector.broadcast %cst_23 : f32 to vector<2x32xf32>
    %76 = arith.mulf %74, %75 : vector<2x32xf32>
    %cst_24 = arith.constant 5.000000e-01 : f32
    %77 = vector.broadcast %cst_24 : f32 to vector<2x32xf32>
    %78 = arith.addf %76, %77 : vector<2x32xf32>
    %79 = vector.extract_strided_slice %68 {offsets = [0, 64], sizes = [2, 32], strides = [1, 1]} : vector<2x128xf32> to vector<2x32xf32>
    %80 = vector.extract_strided_slice %68 {offsets = [0, 96], sizes = [2, 32], strides = [1, 1]} : vector<2x128xf32> to vector<2x32xf32>
    %cst_25 = arith.constant 5.000000e-01 : f32
    %81 = vector.broadcast %cst_25 : f32 to vector<2x32xf32>
    %82 = arith.mulf %80, %81 : vector<2x32xf32>
    %cst_26 = arith.constant 5.000000e-01 : f32
    %83 = vector.broadcast %cst_26 : f32 to vector<2x32xf32>
    %84 = arith.addf %82, %83 : vector<2x32xf32>
    %85 = arith.mulf %78, %61 : vector<2x32xf32>
    %86 = arith.mulf %73, %79 : vector<2x32xf32>
    %87 = arith.addf %85, %86 : vector<2x32xf32>
    %88 = math.tanh %87 : vector<2x32xf32>
    %89 = arith.mulf %84, %88 : vector<2x32xf32>
    %90 = vector.extract_strided_slice %9 {offsets = [0, 3, 0], sizes = [2, 1, 128], strides = [1, 1, 1]} : vector<2x8x128xf32> to vector<2x1x128xf32>
    %91 = vector.shape_cast %90 : vector<2x1x128xf32> to vector<2x128xf32>
    %cst_27 = arith.constant dense<0.000000e+00> : vector<2x128xf32>
    %92 = tpu.matmul %89, %2, %cst_27 {dimension_numbers = #tpu.dot_dimension_numbers<[1], [0], [0], [1], [0, 0, 1, 1], [], []>} : vector<2x32xf32>, vector<32x128xf32>, vector<2x128xf32> -> vector<2x128xf32>
    %93 = arith.addf %91, %92 : vector<2x128xf32>
    %94 = math.tanh %93 : vector<2x128xf32>
    %95 = vector.extract_strided_slice %94 {offsets = [0, 0], sizes = [2, 32], strides = [1, 1]} : vector<2x128xf32> to vector<2x32xf32>
    %cst_28 = arith.constant 5.000000e-01 : f32
    %96 = vector.broadcast %cst_28 : f32 to vector<2x32xf32>
    %97 = arith.mulf %95, %96 : vector<2x32xf32>
    %cst_29 = arith.constant 5.000000e-01 : f32
    %98 = vector.broadcast %cst_29 : f32 to vector<2x32xf32>
    %99 = arith.addf %97, %98 : vector<2x32xf32>
    %100 = vector.extract_strided_slice %94 {offsets = [0, 32], sizes = [2, 32], strides = [1, 1]} : vector<2x128xf32> to vector<2x32xf32>
    %cst_30 = arith.constant 5.000000e-01 : f32
    %101 = vector.broadcast %cst_30 : f32 to vector<2x32xf32>
    %102 = arith.mulf %100, %101 : vector<2x32xf32>
    %cst_31 = arith.constant 5.000000e-01 : f32
    %103 = vector.broadcast %cst_31 : f32 to vector<2x32xf32>
    %104 = arith.addf %102, %103 : vector<2x32xf32>
    %105 = vector.extract_strided_slice %94 {offsets = [0, 64], sizes = [2, 32], strides = [1, 1]} : vector<2x128xf32> to vector<2x32xf32>
    %106 = vector.extract_strided_slice %94 {offsets = [0, 96], sizes = [2, 32], strides = [1, 1]} : vector<2x128xf32> to vector<2x32xf32>
    %cst_32 = arith.constant 5.000000e-01 : f32
    %107 = vector.broadcast %cst_32 : f32 to vector<2x32xf32>
    %108 = arith.mulf %106, %107 : vector<2x32xf32>
    %cst_33 = arith.constant 5.000000e-01 : f32
    %109 = vector.broadcast %cst_33 : f32 to vector<2x32xf32>
    %110 = arith.addf %108, %109 : vector<2x32xf32>
    %111 = arith.mulf %104, %87 : vector<2x32xf32>
    %112 = arith.mulf %99, %105 : vector<2x32xf32>
    %113 = arith.addf %111, %112 : vector<2x32xf32>
    %114 = math.tanh %113 : vector<2x32xf32>
    %115 = arith.mulf %110, %114 : vector<2x32xf32>
    %116 = vector.extract_strided_slice %9 {offsets = [0, 4, 0], sizes = [2, 1, 128], strides = [1, 1, 1]} : vector<2x8x128xf32> to vector<2x1x128xf32>
    %117 = vector.shape_cast %116 : vector<2x1x128xf32> to vector<2x128xf32>
    %cst_34 = arith.constant dense<0.000000e+00> : vector<2x128xf32>
    %118 = tpu.matmul %115, %2, %cst_34 {dimension_numbers = #tpu.dot_dimension_numbers<[1], [0], [0], [1], [0, 0, 1, 1], [], []>} : vector<2x32xf32>, vector<32x128xf32>, vector<2x128xf32> -> vector<2x128xf32>
    %119 = arith.addf %117, %118 : vector<2x128xf32>
    %120 = math.tanh %119 : vector<2x128xf32>
    %121 = vector.extract_strided_slice %120 {offsets = [0, 0], sizes = [2, 32], strides = [1, 1]} : vector<2x128xf32> to vector<2x32xf32>
    %cst_35 = arith.constant 5.000000e-01 : f32
    %122 = vector.broadcast %cst_35 : f32 to vector<2x32xf32>
    %123 = arith.mulf %121, %122 : vector<2x32xf32>
    %cst_36 = arith.constant 5.000000e-01 : f32
    %124 = vector.broadcast %cst_36 : f32 to vector<2x32xf32>
    %125 = arith.addf %123, %124 : vector<2x32xf32>
    %126 = vector.extract_strided_slice %120 {offsets = [0, 32], sizes = [2, 32], strides = [1, 1]} : vector<2x128xf32> to vector<2x32xf32>
    %cst_37 = arith.constant 5.000000e-01 : f32
    %127 = vector.broadcast %cst_37 : f32 to vector<2x32xf32>
    %128 = arith.mulf %126, %127 : vector<2x32xf32>
    %cst_38 = arith.constant 5.000000e-01 : f32
    %129 = vector.broadcast %cst_38 : f32 to vector<2x32xf32>
    %130 = arith.addf %128, %129 : vector<2x32xf32>
    %131 = vector.extract_strided_slice %120 {offsets = [0, 64], sizes = [2, 32], strides = [1, 1]} : vector<2x128xf32> to vector<2x32xf32>
    %132 = vector.extract_strided_slice %120 {offsets = [0, 96], sizes = [2, 32], strides = [1, 1]} : vector<2x128xf32> to vector<2x32xf32>
    %cst_39 = arith.constant 5.000000e-01 : f32
    %133 = vector.broadcast %cst_39 : f32 to vector<2x32xf32>
    %134 = arith.mulf %132, %133 : vector<2x32xf32>
    %cst_40 = arith.constant 5.000000e-01 : f32
    %135 = vector.broadcast %cst_40 : f32 to vector<2x32xf32>
    %136 = arith.addf %134, %135 : vector<2x32xf32>
    %137 = arith.mulf %130, %113 : vector<2x32xf32>
    %138 = arith.mulf %125, %131 : vector<2x32xf32>
    %139 = arith.addf %137, %138 : vector<2x32xf32>
    %140 = math.tanh %139 : vector<2x32xf32>
    %141 = arith.mulf %136, %140 : vector<2x32xf32>
    %142 = vector.extract_strided_slice %9 {offsets = [0, 5, 0], sizes = [2, 1, 128], strides = [1, 1, 1]} : vector<2x8x128xf32> to vector<2x1x128xf32>
    %143 = vector.shape_cast %142 : vector<2x1x128xf32> to vector<2x128xf32>
    %cst_41 = arith.constant dense<0.000000e+00> : vector<2x128xf32>
    %144 = tpu.matmul %141, %2, %cst_41 {dimension_numbers = #tpu.dot_dimension_numbers<[1], [0], [0], [1], [0, 0, 1, 1], [], []>} : vector<2x32xf32>, vector<32x128xf32>, vector<2x128xf32> -> vector<2x128xf32>
    %145 = arith.addf %143, %144 : vector<2x128xf32>
    %146 = math.tanh %145 : vector<2x128xf32>
    %147 = vector.extract_strided_slice %146 {offsets = [0, 0], sizes = [2, 32], strides = [1, 1]} : vector<2x128xf32> to vector<2x32xf32>
    %cst_42 = arith.constant 5.000000e-01 : f32
    %148 = vector.broadcast %cst_42 : f32 to vector<2x32xf32>
    %149 = arith.mulf %147, %148 : vector<2x32xf32>
    %cst_43 = arith.constant 5.000000e-01 : f32
    %150 = vector.broadcast %cst_43 : f32 to vector<2x32xf32>
    %151 = arith.addf %149, %150 : vector<2x32xf32>
    %152 = vector.extract_strided_slice %146 {offsets = [0, 32], sizes = [2, 32], strides = [1, 1]} : vector<2x128xf32> to vector<2x32xf32>
    %cst_44 = arith.constant 5.000000e-01 : f32
    %153 = vector.broadcast %cst_44 : f32 to vector<2x32xf32>
    %154 = arith.mulf %152, %153 : vector<2x32xf32>
    %cst_45 = arith.constant 5.000000e-01 : f32
    %155 = vector.broadcast %cst_45 : f32 to vector<2x32xf32>
    %156 = arith.addf %154, %155 : vector<2x32xf32>
    %157 = vector.extract_strided_slice %146 {offsets = [0, 64], sizes = [2, 32], strides = [1, 1]} : vector<2x128xf32> to vector<2x32xf32>
    %158 = vector.extract_strided_slice %146 {offsets = [0, 96], sizes = [2, 32], strides = [1, 1]} : vector<2x128xf32> to vector<2x32xf32>
    %cst_46 = arith.constant 5.000000e-01 : f32
    %159 = vector.broadcast %cst_46 : f32 to vector<2x32xf32>
    %160 = arith.mulf %158, %159 : vector<2x32xf32>
    %cst_47 = arith.constant 5.000000e-01 : f32
    %161 = vector.broadcast %cst_47 : f32 to vector<2x32xf32>
    %162 = arith.addf %160, %161 : vector<2x32xf32>
    %163 = arith.mulf %156, %139 : vector<2x32xf32>
    %164 = arith.mulf %151, %157 : vector<2x32xf32>
    %165 = arith.addf %163, %164 : vector<2x32xf32>
    %166 = math.tanh %165 : vector<2x32xf32>
    %167 = arith.mulf %162, %166 : vector<2x32xf32>
    %168 = vector.extract_strided_slice %9 {offsets = [0, 6, 0], sizes = [2, 1, 128], strides = [1, 1, 1]} : vector<2x8x128xf32> to vector<2x1x128xf32>
    %169 = vector.shape_cast %168 : vector<2x1x128xf32> to vector<2x128xf32>
    %cst_48 = arith.constant dense<0.000000e+00> : vector<2x128xf32>
    %170 = tpu.matmul %167, %2, %cst_48 {dimension_numbers = #tpu.dot_dimension_numbers<[1], [0], [0], [1], [0, 0, 1, 1], [], []>} : vector<2x32xf32>, vector<32x128xf32>, vector<2x128xf32> -> vector<2x128xf32>
    %171 = arith.addf %169, %170 : vector<2x128xf32>
    %172 = math.tanh %171 : vector<2x128xf32>
    %173 = vector.extract_strided_slice %172 {offsets = [0, 0], sizes = [2, 32], strides = [1, 1]} : vector<2x128xf32> to vector<2x32xf32>
    %cst_49 = arith.constant 5.000000e-01 : f32
    %174 = vector.broadcast %cst_49 : f32 to vector<2x32xf32>
    %175 = arith.mulf %173, %174 : vector<2x32xf32>
    %cst_50 = arith.constant 5.000000e-01 : f32
    %176 = vector.broadcast %cst_50 : f32 to vector<2x32xf32>
    %177 = arith.addf %175, %176 : vector<2x32xf32>
    %178 = vector.extract_strided_slice %172 {offsets = [0, 32], sizes = [2, 32], strides = [1, 1]} : vector<2x128xf32> to vector<2x32xf32>
    %cst_51 = arith.constant 5.000000e-01 : f32
    %179 = vector.broadcast %cst_51 : f32 to vector<2x32xf32>
    %180 = arith.mulf %178, %179 : vector<2x32xf32>
    %cst_52 = arith.constant 5.000000e-01 : f32
    %181 = vector.broadcast %cst_52 : f32 to vector<2x32xf32>
    %182 = arith.addf %180, %181 : vector<2x32xf32>
    %183 = vector.extract_strided_slice %172 {offsets = [0, 64], sizes = [2, 32], strides = [1, 1]} : vector<2x128xf32> to vector<2x32xf32>
    %184 = vector.extract_strided_slice %172 {offsets = [0, 96], sizes = [2, 32], strides = [1, 1]} : vector<2x128xf32> to vector<2x32xf32>
    %cst_53 = arith.constant 5.000000e-01 : f32
    %185 = vector.broadcast %cst_53 : f32 to vector<2x32xf32>
    %186 = arith.mulf %184, %185 : vector<2x32xf32>
    %cst_54 = arith.constant 5.000000e-01 : f32
    %187 = vector.broadcast %cst_54 : f32 to vector<2x32xf32>
    %188 = arith.addf %186, %187 : vector<2x32xf32>
    %189 = arith.mulf %182, %165 : vector<2x32xf32>
    %190 = arith.mulf %177, %183 : vector<2x32xf32>
    %191 = arith.addf %189, %190 : vector<2x32xf32>
    %192 = math.tanh %191 : vector<2x32xf32>
    %193 = arith.mulf %188, %192 : vector<2x32xf32>
    %194 = vector.extract_strided_slice %9 {offsets = [0, 7, 0], sizes = [2, 1, 128], strides = [1, 1, 1]} : vector<2x8x128xf32> to vector<2x1x128xf32>
    %195 = vector.shape_cast %194 : vector<2x1x128xf32> to vector<2x128xf32>
    %cst_55 = arith.constant dense<0.000000e+00> : vector<2x128xf32>
    %196 = tpu.matmul %193, %2, %cst_55 {dimension_numbers = #tpu.dot_dimension_numbers<[1], [0], [0], [1], [0, 0, 1, 1], [], []>} : vector<2x32xf32>, vector<32x128xf32>, vector<2x128xf32> -> vector<2x128xf32>
    %197 = arith.addf %195, %196 : vector<2x128xf32>
    %198 = math.tanh %197 : vector<2x128xf32>
    %199 = vector.extract_strided_slice %198 {offsets = [0, 0], sizes = [2, 32], strides = [1, 1]} : vector<2x128xf32> to vector<2x32xf32>
    %cst_56 = arith.constant 5.000000e-01 : f32
    %200 = vector.broadcast %cst_56 : f32 to vector<2x32xf32>
    %201 = arith.mulf %199, %200 : vector<2x32xf32>
    %cst_57 = arith.constant 5.000000e-01 : f32
    %202 = vector.broadcast %cst_57 : f32 to vector<2x32xf32>
    %203 = arith.addf %201, %202 : vector<2x32xf32>
    %204 = vector.extract_strided_slice %198 {offsets = [0, 32], sizes = [2, 32], strides = [1, 1]} : vector<2x128xf32> to vector<2x32xf32>
    %cst_58 = arith.constant 5.000000e-01 : f32
    %205 = vector.broadcast %cst_58 : f32 to vector<2x32xf32>
    %206 = arith.mulf %204, %205 : vector<2x32xf32>
    %cst_59 = arith.constant 5.000000e-01 : f32
    %207 = vector.broadcast %cst_59 : f32 to vector<2x32xf32>
    %208 = arith.addf %206, %207 : vector<2x32xf32>
    %209 = vector.extract_strided_slice %198 {offsets = [0, 64], sizes = [2, 32], strides = [1, 1]} : vector<2x128xf32> to vector<2x32xf32>
    %210 = vector.extract_strided_slice %198 {offsets = [0, 96], sizes = [2, 32], strides = [1, 1]} : vector<2x128xf32> to vector<2x32xf32>
    %cst_60 = arith.constant 5.000000e-01 : f32
    %211 = vector.broadcast %cst_60 : f32 to vector<2x32xf32>
    %212 = arith.mulf %210, %211 : vector<2x32xf32>
    %cst_61 = arith.constant 5.000000e-01 : f32
    %213 = vector.broadcast %cst_61 : f32 to vector<2x32xf32>
    %214 = arith.addf %212, %213 : vector<2x32xf32>
    %215 = arith.mulf %208, %191 : vector<2x32xf32>
    %216 = arith.mulf %203, %209 : vector<2x32xf32>
    %217 = arith.addf %215, %216 : vector<2x32xf32>
    %218 = math.tanh %217 : vector<2x32xf32>
    %219 = arith.mulf %214, %218 : vector<2x32xf32>
    %c0_62 = arith.constant 0 : index
    %c0_63 = arith.constant 0 : index
    %220 = vector.load %arg2[%c0_62, %c0_63] : memref<33x8xf32, #tpu.memory_space<vmem>>, vector<33x8xf32>
    %221 = vector.extract_strided_slice %220 {offsets = [0, 0], sizes = [32, 8], strides = [1, 1]} : vector<33x8xf32> to vector<32x8xf32>
    %222 = vector.extract_strided_slice %220 {offsets = [32, 0], sizes = [1, 8], strides = [1, 1]} : vector<33x8xf32> to vector<1x8xf32>
    %cst_64 = arith.constant dense<0.000000e+00> : vector<2x8xf32>
    %223 = tpu.matmul %219, %221, %cst_64 {dimension_numbers = #tpu.dot_dimension_numbers<[1], [0], [0], [1], [0, 0, 1, 1], [], []>} : vector<2x32xf32>, vector<32x8xf32>, vector<2x8xf32> -> vector<2x8xf32>
    %224 = vector.broadcast %222 : vector<1x8xf32> to vector<2x8xf32>
    %225 = arith.addf %223, %224 : vector<2x8xf32>
    %c0_65 = arith.constant 0 : index
    %c0_66 = arith.constant 0 : index
    %226 = vector.load %arg3[%c0_65, %c0_66] : memref<2x8xf32, #tpu.memory_space<vmem>>, vector<2x8xf32>
    tpu.vector_store %arg3[%c0_65, %c0_66], %225 {strides = array<i32>} : memref<2x8xf32, #tpu.memory_space<vmem>>, vector<2x8xf32>,
    return
  }
}

</mosaic_0001>

<llo_original>
// kernel: tpu_custom_call.1
$region0: #{tpu_custom_call.1}
  #allocation0 [shape = 'u32[]', space=smem, size = 0x4, offset = 0x4, fixed_abs, tag = 'smem constant byte address 0x4 - core index']
  #allocation1 [shape = 'u32[72,128]{1,0:T(1,128)}', space=vmem, size = 0x9000, scoped, tag = 'internal scratch']
  %s0 = inlined_call_operand.vmem [shape: f32[2,8,16], index: 0, kind: input, shape index: {}]
  %s1 = inlined_call_operand.hbm [shape: f32[49,128], index: 1, kind: input, shape index: {}]
  %s2 = inlined_call_operand.vmem [shape: f32[33,8], index: 2, kind: input, shape index: {}]
  %s3 = inlined_call_operand.hbm [shape: f32[2,8], index: 3, kind: output, shape index: {}]
  %s4 = sld [smem:[#allocation0]]
  $region26: #{tpu_custom_call.1} parent=0
    _
  %s6 = ssub.s32 1, %s4
  %s7 = scalar_select 0, %s6, %s4
  $region1: #{tpu_custom_call.1} parent=0
    #allocation2 [shape = 'u8[28672]{0}', space=vmem, size = 0x7000, scoped, tag = 'input window, operand 1, single buffered']
    #allocation3 [shape = 's32[1]{0}', space=sflag, size = 0x4, scoped, tag = 'scoped memory for tpu_custom_call.1']
    #allocation4 [shape = 's32[1]{0}', space=sflag, size = 0x4, scoped, tag = 'scoped memory for tpu_custom_call.1']
    #allocation5 [shape = 'u8[1024]{0}', space=vmem, size = 0x400, scoped, tag = 'output window, operand 0, single buffered']
    %8 = vsyncpa [#allocation3], 0
    %9 = vsyncpa [#allocation4], 0
    // Predicated region
    $region2: #{tpu_custom_call.1} parent=1 // pred_check
      _
    $region3: #{tpu_custom_call.1} parent=1 // pred_check_branch
      %11 = sbr.rel (0) target = $region5
    $region4: #{tpu_custom_call.1} parent=1 // pred_region
      _
    $region5: #{tpu_custom_call.1} parent=1 // pred_fallthru
      _
    // Predicated region
    $region6: #{tpu_custom_call.1} parent=1 // pred_check
      _
    $region7: #{tpu_custom_call.1} parent=1 // pred_check_branch
      %13 = sbr.rel (0) target = $region9
    $region8: #{tpu_custom_call.1} parent=1 // pred_region
      %15 = vsyncadd [#allocation3], 0
      %s16 = sshll.u32 %s1, 4
      %s17 = int_to_ptr.hbm [resolvable:$true] %s16
      %s18 = sshll.u32 [#allocation2], 4
      %s19 = int_to_ptr.vmem [resolvable:$true] %s18
      %24 = dma.hbm_to_vmem [thread:$0]  %s17, 896, %s19, [#allocation3], 128, 128, 8
    $region9: #{tpu_custom_call.1} parent=1 // pred_fallthru
      _
    // Predicated region
    $region10: #{tpu_custom_call.1} parent=1 // pred_check
      _
    $region11: #{tpu_custom_call.1} parent=1 // pred_check_branch
      %26 = sbr.rel (0) target = $region13
    $region12: #{tpu_custom_call.1} parent=1 // pred_region
      _
    $region13: #{tpu_custom_call.1} parent=1 // pred_fallthru
      _
    // Predicated region
    $region14: #{tpu_custom_call.1} parent=1 // pred_check
      _
    $region15: #{tpu_custom_call.1} parent=1 // pred_check_branch
      %28 = sbr.rel (0) target = $region17
    $region16: #{tpu_custom_call.1} parent=1 // pred_region
      %30 = dma.done [#allocation3], 896
    $region17: #{tpu_custom_call.1} parent=1 // pred_fallthru
      _
    %v31 = vld [vmem:[#allocation2] sm:$0xff]
    %v32 = vld [vmem:[#allocation2 + $0x8] sm:$0xff]
    %v33 = vld [vmem:[#allocation2 + $0x10] sm:$0xff]
    %v34 = vld [vmem:[#allocation2 + $0x18] sm:$0xff]
    %v35 = vld [vmem:[#allocation2 + $0x20] sm:$0xff]
    %v36 = vld [vmem:[#allocation2 + $0x28] sm:$0xff]
    %v37 = vld [vmem:[#allocation2 + $0x30] sm:$0x1]
    %v38 = vld [vmem:[%s0] sm:$0xff]
    %v39 = vld [vmem:[%s0 + $0x8] sm:$0xff]
    %v40 = vperm.slane %v37, 0
    %vm41 = vcmask 130048
    %v43 = vsel %vm41, %v38, 0
    %v46 = vsel %vm41, %v39, 0
    %48 = vmatpush.msra.mxu0 0.0
    %49 = vmatpush.msra.mxu0 0.0
    %50 = vmatpush.msra.mxu0 0.0
    %51 = vmatpush.msra.mxu0 0.0
    %52 = vmatpush.msra.mxu0 0.0
    %53 = vmatpush.msra.mxu0 0.0
    %54 = vmatpush.msra.mxu0 0.0
    %55 = vmatpush.msra.mxu0 0.0
    %56 = vmatpush.msra.mxu0 0.0
    %57 = vmatpush.msra.mxu0 0.0
    %58 = vmatpush.msra.mxu0 0.0
    %59 = vmatpush.msra.mxu0 0.0
    %60 = vmatpush.msra.mxu0 0.0
    %61 = vmatpush.msra.mxu0 0.0
    %62 = vmatpush.msra.mxu0 %v32
    %63 = vmatpush.msra.mxu0 %v31
    %64 = vmatmul.f32.gmra.mxu0 %v43
    %v65 = vpop.f32.mrf.mxu0
    %v66 = vadd.f32 %v40, %v65
    %67 = vmatmul.f32.gmra.mxu0 %v46
    %v68 = vpop.f32.mrf.mxu0
    %v69 = vadd.f32 %v40, %v68
    %70 = vdwg.mxu0
    %vm71 = vcmask 261120
    %v73 = vsel %vm71, 0.0, 0
    %75 = vmatpush.msra.mxu0 0.0
    %76 = vmatpush.msra.mxu0 0.0
    %77 = vmatpush.msra.mxu0 0.0
    %78 = vmatpush.msra.mxu0 0.0
    %79 = vmatpush.msra.mxu0 0.0
    %80 = vmatpush.msra.mxu0 0.0
    %81 = vmatpush.msra.mxu0 0.0
    %82 = vmatpush.msra.mxu0 0.0
    %83 = vmatpush.msra.mxu0 0.0
    %84 = vmatpush.msra.mxu0 0.0
    %85 = vmatpush.msra.mxu0 0.0
    %86 = vmatpush.msra.mxu0 0.0
    %87 = vmatpush.msra.mxu0 %v36
    %88 = vmatpush.msra.mxu0 %v35
    %89 = vmatpush.msra.mxu0 %v34
    %90 = vmatpush.msra.mxu0 %v33
    %91 = vmatmul.f32.gmra.mxu0 %v73
    %v92 = vpop.f32.mrf.mxu0
    %v93 = vadd.f32 0.0, %v92
    %94 = vdwg.mxu0
    %v96 = vrot.slane %v93, 1
    %v99 = vadd.f32 %v66, %v93
    %v100 = vadd.f32 %v69, %v96
    %v101 = vtanh.pop %v99
    %v102 = vtanh.pop %v100
    %v103 = vmul.f32 %v101, 0.5
    %v104 = vmul.f32 %v102, 0.5
    %v105 = vadd.f32 %v103, 0.5
    %v106 = vadd.f32 %v104, 0.5
    %v107 = vmul.f32 %v105, 0.0
    %v108 = vmul.f32 %v106, 0.0
    %111 = vrot.lane.b32.xlu0 %v101, 64
    %v112 = vpop.permute.xlu0 %111
    %113 = vrot.lane.b32.xlu0 %v102, 64
    %v114 = vpop.permute.xlu0 %113
    %v117 = vmul.f32 %v105, %v112
    %v118 = vmul.f32 %v106, %v114
    %121 = vrot.lane.b32.xlu0 %v117, 32
    %v122 = vpop.permute.xlu0 %121
    %123 = vrot.lane.b32.xlu0 %v118, 32
    %v124 = vpop.permute.xlu0 %123
    %v127 = vadd.f32 %v107, %v122
    %v128 = vadd.f32 %v108, %v124
    %v129 = vtanh.pop %v127
    %v130 = vtanh.pop %v128
    %133 = vrot.lane.b32.xlu0 %v129, 64
    %v134 = vpop.permute.xlu0 %133
    %135 = vrot.lane.b32.xlu0 %v130, 64
    %v136 = vpop.permute.xlu0 %135
    %v139 = vmul.f32 %v105, %v134
    %v140 = vmul.f32 %v106, %v136
    %v143 = vrot.slane %v140, 7
    %vm144 = vcmask 1041409
    %v145 = vsel %vm144, %v143, %v139
    %146 = vrot.lane.b32.xlu0 %v145, 32
    %v147 = vpop.permute.xlu0 %146
    %v148 = vsel %vm71, %v147, 0
    %150 = vmatpush.msra.mxu0 0.0
    %151 = vmatpush.msra.mxu0 0.0
    %152 = vmatpush.msra.mxu0 0.0
    %153 = vmatpush.msra.mxu0 0.0
    %154 = vmatpush.msra.mxu0 0.0
    %155 = vmatpush.msra.mxu0 0.0
    %156 = vmatpush.msra.mxu0 0.0
    %157 = vmatpush.msra.mxu0 0.0
    %158 = vmatpush.msra.mxu0 0.0
    %159 = vmatpush.msra.mxu0 0.0
    %160 = vmatpush.msra.mxu0 0.0
    %161 = vmatpush.msra.mxu0 0.0
    %162 = vmatpush.msra.mxu0 %v36
    %163 = vmatpush.msra.mxu0 %v35
    %164 = vmatpush.msra.mxu0 %v34
    %165 = vmatpush.msra.mxu0 %v33
    %166 = vmatmul.f32.gmra.mxu0 %v148
    %v167 = vpop.f32.mrf.mxu0
    %v168 = vadd.f32 0.0, %v167
    %169 = vdwg.mxu0
    %v171 = vrot.slane %v168, 7
    %v174 = vadd.f32 %v66, %v171
    %v175 = vadd.f32 %v69, %v168
    %v176 = vtanh.pop %v174
    %v177 = vtanh.pop %v175
    %v178 = vmul.f32 %v176, 0.5
    %v179 = vmul.f32 %v177, 0.5
    %v180 = vadd.f32 %v178, 0.5
    %v181 = vadd.f32 %v179, 0.5
    %v184 = vrot.slane %v127, 7
    %v185 = vrot.slane %v128, 7
    %v188 = vmul.f32 %v180, %v184
    %v189 = vmul.f32 %v181, %v185
    %192 = vrot.lane.b32.xlu0 %v176, 64
    %v193 = vpop.permute.xlu0 %192
    %194 = vrot.lane.b32.xlu0 %v177, 64
    %v195 = vpop.permute.xlu0 %194
    %v198 = vmul.f32 %v180, %v193
    %v199 = vmul.f32 %v181, %v195
    %202 = vrot.lane.b32.xlu0 %v198, 32
    %v203 = vpop.permute.xlu0 %202
    %204 = vrot.lane.b32.xlu0 %v199, 32
    %v205 = vpop.permute.xlu0 %204
    %v208 = vadd.f32 %v188, %v203
    %v209 = vadd.f32 %v189, %v205
    %v210 = vtanh.pop %v208
    %v211 = vtanh.pop %v209
    %214 = vrot.lane.b32.xlu0 %v210, 64
    %v215 = vpop.permute.xlu0 %214
    %216 = vrot.lane.b32.xlu0 %v211, 64
    %v217 = vpop.permute.xlu0 %216
    %v220 = vmul.f32 %v180, %v215
    %v221 = vmul.f32 %v181, %v217
    %v224 = vrot.slane %v220, 1
    %v225 = vsel %vm144, %v221, %v224
    %226 = vrot.lane.b32.xlu0 %v225, 32
    %v227 = vpop.permute.xlu0 %226
    %v228 = vsel %vm71, %v227, 0
    %230 = vmatpush.msra.mxu0 0.0
    %231 = vmatpush.msra.mxu0 0.0
    %232 = vmatpush.msra.mxu0 0.0
    %233 = vmatpush.msra.mxu0 0.0
    %234 = vmatpush.msra.mxu0 0.0
    %235 = vmatpush.msra.mxu0 0.0
    %236 = vmatpush.msra.mxu0 0.0
    %237 = vmatpush.msra.mxu0 0.0
    %238 = vmatpush.msra.mxu0 0.0
    %239 = vmatpush.msra.mxu0 0.0
    %240 = vmatpush.msra.mxu0 0.0
    %241 = vmatpush.msra.mxu0 0.0
    %242 = vmatpush.msra.mxu0 %v36
    %243 = vmatpush.msra.mxu0 %v35
    %244 = vmatpush.msra.mxu0 %v34
    %245 = vmatpush.msra.mxu0 %v33
    %246 = vmatmul.f32.gmra.mxu0 %v228
    %v247 = vpop.f32.mrf.mxu0
    %v248 = vadd.f32 0.0, %v247
    %249 = vdwg.mxu0
    %v251 = vrot.slane %v248, 6
    %v252 = vrot.slane %v248, 7
    %v255 = vadd.f32 %v66, %v251
    %v256 = vadd.f32 %v69, %v252
    %v257 = vtanh.pop %v255
    %v258 = vtanh.pop %v256
    %v259 = vmul.f32 %v257, 0.5
    %v260 = vmul.f32 %v258, 0.5
    %v261 = vadd.f32 %v259, 0.5
    %v262 = vadd.f32 %v260, 0.5
    %v265 = vrot.slane %v208, 7
    %v266 = vrot.slane %v209, 7
    %v269 = vmul.f32 %v261, %v265
    %v270 = vmul.f32 %v262, %v266
    %273 = vrot.lane.b32.xlu0 %v257, 64
    %v274 = vpop.permute.xlu0 %273
    %275 = vrot.lane.b32.xlu0 %v258, 64
    %v276 = vpop.permute.xlu0 %275
    %v279 = vmul.f32 %v261, %v274
    %v280 = vmul.f32 %v262, %v276
    %283 = vrot.lane.b32.xlu0 %v279, 32
    %v284 = vpop.permute.xlu0 %283
    %285 = vrot.lane.b32.xlu0 %v280, 32
    %v286 = vpop.permute.xlu0 %285
    %v289 = vadd.f32 %v269, %v284
    %v290 = vadd.f32 %v270, %v286
    %v291 = vtanh.pop %v289
    %v292 = vtanh.pop %v290
    %295 = vrot.lane.b32.xlu0 %v291, 64
    %v296 = vpop.permute.xlu0 %295
    %297 = vrot.lane.b32.xlu0 %v292, 64
    %v298 = vpop.permute.xlu0 %297
    %v301 = vmul.f32 %v261, %v296
    %v302 = vmul.f32 %v262, %v298
    %v305 = vrot.slane %v301, 2
    %v306 = vrot.slane %v302, 1
    %v307 = vsel %vm144, %v306, %v305
    %308 = vrot.lane.b32.xlu0 %v307, 32
    %v309 = vpop.permute.xlu0 %308
    %v310 = vsel %vm71, %v309, 0
    %312 = vmatpush.msra.mxu0 0.0
    %313 = vmatpush.msra.mxu0 0.0
    %314 = vmatpush.msra.mxu0 0.0
    %315 = vmatpush.msra.mxu0 0.0
    %316 = vmatpush.msra.mxu0 0.0
    %317 = vmatpush.msra.mxu0 0.0
    %318 = vmatpush.msra.mxu0 0.0
    %319 = vmatpush.msra.mxu0 0.0
    %320 = vmatpush.msra.mxu0 0.0
    %321 = vmatpush.msra.mxu0 0.0
    %322 = vmatpush.msra.mxu0 0.0
    %323 = vmatpush.msra.mxu0 0.0
    %324 = vmatpush.msra.mxu0 %v36
    %325 = vmatpush.msra.mxu0 %v35
    %326 = vmatpush.msra.mxu0 %v34
    %327 = vmatpush.msra.mxu0 %v33
    %328 = vmatmul.f32.gmra.mxu0 %v310
    %v329 = vpop.f32.mrf.mxu0
    %v330 = vadd.f32 0.0, %v329
    %331 = vdwg.mxu0
    %v333 = vrot.slane %v330, 5
    %v334 = vrot.slane %v330, 6
    %v337 = vadd.f32 %v66, %v333
    %v338 = vadd.f32 %v69, %v334
    %v339 = vtanh.pop %v337
    %v340 = vtanh.pop %v338
    %v341 = vmul.f32 %v339, 0.5
    %v342 = vmul.f32 %v340, 0.5
    %v343 = vadd.f32 %v341, 0.5
    %v344 = vadd.f32 %v342, 0.5
    %v347 = vrot.slane %v289, 7
    %v348 = vrot.slane %v290, 7
    %v351 = vmul.f32 %v343, %v347
    %v352 = vmul.f32 %v344, %v348
    %355 = vrot.lane.b32.xlu0 %v339, 64
    %v356 = vpop.permute.xlu0 %355
    %357 = vrot.lane.b32.xlu0 %v340, 64
    %v358 = vpop.permute.xlu0 %357
    %v361 = vmul.f32 %v343, %v356
    %v362 = vmul.f32 %v344, %v358
    %365 = vrot.lane.b32.xlu0 %v361, 32
    %v366 = vpop.permute.xlu0 %365
    %367 = vrot.lane.b32.xlu0 %v362, 32
    %v368 = vpop.permute.xlu0 %367
    %v371 = vadd.f32 %v351, %v366
    %v372 = vadd.f32 %v352, %v368
    %v373 = vtanh.pop %v371
    %v374 = vtanh.pop %v372
    %377 = vrot.lane.b32.xlu0 %v373, 64
    %v378 = vpop.permute.xlu0 %377
    %379 = vrot.lane.b32.xlu0 %v374, 64
    %v380 = vpop.permute.xlu0 %379
    %v383 = vmul.f32 %v343, %v378
    %v384 = vmul.f32 %v344, %v380
    %v387 = vrot.slane %v383, 3
    %v388 = vrot.slane %v384, 2
    %v389 = vsel %vm144, %v388, %v387
    %390 = vrot.lane.b32.xlu0 %v389, 32
    %v391 = vpop.permute.xlu0 %390
    %v392 = vsel %vm71, %v391, 0
    %394 = vmatpush.msra.mxu0 0.0
    %395 = vmatpush.msra.mxu0 0.0
    %396 = vmatpush.msra.mxu0 0.0
    %397 = vmatpush.msra.mxu0 0.0
    %398 = vmatpush.msra.mxu0 0.0
    %399 = vmatpush.msra.mxu0 0.0
    %400 = vmatpush.msra.mxu0 0.0
    %401 = vmatpush.msra.mxu0 0.0
    %402 = vmatpush.msra.mxu0 0.0
    %403 = vmatpush.msra.mxu0 0.0
    %404 = vmatpush.msra.mxu0 0.0
    %405 = vmatpush.msra.mxu0 0.0
    %406 = vmatpush.msra.mxu0 %v36
    %407 = vmatpush.msra.mxu0 %v35
    %408 = vmatpush.msra.mxu0 %v34
    %409 = vmatpush.msra.mxu0 %v33
    %410 = vmatmul.f32.gmra.mxu0 %v392
    %v411 = vpop.f32.mrf.mxu0
    %v412 = vadd.f32 0.0, %v411
    %413 = vdwg.mxu0
    %v415 = vrot.slane %v412, 4
    %v416 = vrot.slane %v412, 5
    %v419 = vadd.f32 %v66, %v415
    %v420 = vadd.f32 %v69, %v416
    %v421 = vtanh.pop %v419
    %v422 = vtanh.pop %v420
    %v423 = vmul.f32 %v421, 0.5
    %v424 = vmul.f32 %v422, 0.5
    %v425 = vadd.f32 %v423, 0.5
    %v426 = vadd.f32 %v424, 0.5
    %v429 = vrot.slane %v371, 7
    %v430 = vrot.slane %v372, 7
    %v433 = vmul.f32 %v425, %v429
    %v434 = vmul.f32 %v426, %v430
    %437 = vrot.lane.b32.xlu0 %v421, 64
    %v438 = vpop.permute.xlu0 %437
    %439 = vrot.lane.b32.xlu0 %v422, 64
    %v440 = vpop.permute.xlu0 %439
    %v443 = vmul.f32 %v425, %v438
    %v444 = vmul.f32 %v426, %v440
    %447 = vrot.lane.b32.xlu0 %v443, 32
    %v448 = vpop.permute.xlu0 %447
    %449 = vrot.lane.b32.xlu0 %v444, 32
    %v450 = vpop.permute.xlu0 %449
    %v453 = vadd.f32 %v433, %v448
    %v454 = vadd.f32 %v434, %v450
    %v455 = vtanh.pop %v453
    %v456 = vtanh.pop %v454
    %459 = vrot.lane.b32.xlu0 %v455, 64
    %v460 = vpop.permute.xlu0 %459
    %461 = vrot.lane.b32.xlu0 %v456, 64
    %v462 = vpop.permute.xlu0 %461
    %v465 = vmul.f32 %v425, %v460
    %v466 = vmul.f32 %v426, %v462
    %v469 = vrot.slane %v465, 4
    %v470 = vrot.slane %v466, 3
    %v471 = vsel %vm144, %v470, %v469
    %472 = vrot.lane.b32.xlu0 %v471, 32
    %v473 = vpop.permute.xlu0 %472
    %v474 = vsel %vm71, %v473, 0
    %476 = vmatpush.msra.mxu0 0.0
    %477 = vmatpush.msra.mxu0 0.0
    %478 = vmatpush.msra.mxu0 0.0
    %479 = vmatpush.msra.mxu0 0.0
    %480 = vmatpush.msra.mxu0 0.0
    %481 = vmatpush.msra.mxu0 0.0
    %482 = vmatpush.msra.mxu0 0.0
    %483 = vmatpush.msra.mxu0 0.0
    %484 = vmatpush.msra.mxu0 0.0
    %485 = vmatpush.msra.mxu0 0.0
    %486 = vmatpush.msra.mxu0 0.0
    %487 = vmatpush.msra.mxu0 0.0
    %488 = vmatpush.msra.mxu0 %v36
    %489 = vmatpush.msra.mxu0 %v35
    %490 = vmatpush.msra.mxu0 %v34
    %491 = vmatpush.msra.mxu0 %v33
    %492 = vmatmul.f32.gmra.mxu0 %v474
    %v493 = vpop.f32.mrf.mxu0
    %v494 = vadd.f32 0.0, %v493
    %495 = vdwg.mxu0
    %v497 = vrot.slane %v494, 3
    %v498 = vrot.slane %v494, 4
    %v501 = vadd.f32 %v66, %v497
    %v502 = vadd.f32 %v69, %v498
    %v503 = vtanh.pop %v501
    %v504 = vtanh.pop %v502
    %v505 = vmul.f32 %v503, 0.5
    %v506 = vmul.f32 %v504, 0.5
    %v507 = vadd.f32 %v505, 0.5
    %v508 = vadd.f32 %v506, 0.5
    %v511 = vrot.slane %v453, 7
    %v512 = vrot.slane %v454, 7
    %v515 = vmul.f32 %v507, %v511
    %v516 = vmul.f32 %v508, %v512
    %519 = vrot.lane.b32.xlu0 %v503, 64
    %v520 = vpop.permute.xlu0 %519
    %521 = vrot.lane.b32.xlu0 %v504, 64
    %v522 = vpop.permute.xlu0 %521
    %v525 = vmul.f32 %v507, %v520
    %v526 = vmul.f32 %v508, %v522
    %529 = vrot.lane.b32.xlu0 %v525, 32
    %v530 = vpop.permute.xlu0 %529
    %531 = vrot.lane.b32.xlu0 %v526, 32
    %v532 = vpop.permute.xlu0 %531
    %v535 = vadd.f32 %v515, %v530
    %v536 = vadd.f32 %v516, %v532
    %v537 = vtanh.pop %v535
    %v538 = vtanh.pop %v536
    %541 = vrot.lane.b32.xlu0 %v537, 64
    %v542 = vpop.permute.xlu0 %541
    %543 = vrot.lane.b32.xlu0 %v538, 64
    %v544 = vpop.permute.xlu0 %543
    %v547 = vmul.f32 %v507, %v542
    %v548 = vmul.f32 %v508, %v544
    %v551 = vrot.slane %v547, 5
    %v552 = vrot.slane %v548, 4
    %v553 = vsel %vm144, %v552, %v551
    %554 = vrot.lane.b32.xlu0 %v553, 32
    %v555 = vpop.permute.xlu0 %554
    %v556 = vsel %vm71, %v555, 0
    %558 = vmatpush.msra.mxu0 0.0
    %559 = vmatpush.msra.mxu0 0.0
    %560 = vmatpush.msra.mxu0 0.0
    %561 = vmatpush.msra.mxu0 0.0
    %562 = vmatpush.msra.mxu0 0.0
    %563 = vmatpush.msra.mxu0 0.0
    %564 = vmatpush.msra.mxu0 0.0
    %565 = vmatpush.msra.mxu0 0.0
    %566 = vmatpush.msra.mxu0 0.0
    %567 = vmatpush.msra.mxu0 0.0
    %568 = vmatpush.msra.mxu0 0.0
    %569 = vmatpush.msra.mxu0 0.0
    %570 = vmatpush.msra.mxu0 %v36
    %571 = vmatpush.msra.mxu0 %v35
    %572 = vmatpush.msra.mxu0 %v34
    %573 = vmatpush.msra.mxu0 %v33
    %574 = vmatmul.f32.gmra.mxu0 %v556
    %v575 = vpop.f32.mrf.mxu0
    %v576 = vadd.f32 0.0, %v575
    %577 = vdwg.mxu0
    %v579 = vrot.slane %v576, 2
    %v580 = vrot.slane %v576, 3
    %v583 = vadd.f32 %v66, %v579
    %v584 = vadd.f32 %v69, %v580
    %v585 = vtanh.pop %v583
    %v586 = vtanh.pop %v584
    %v587 = vmul.f32 %v585, 0.5
    %v588 = vmul.f32 %v586, 0.5
    %v589 = vadd.f32 %v587, 0.5
    %v590 = vadd.f32 %v588, 0.5
    %v593 = vrot.slane %v535, 7
    %v594 = vrot.slane %v536, 7
    %v597 = vmul.f32 %v589, %v593
    %v598 = vmul.f32 %v590, %v594
    %601 = vrot.lane.b32.xlu0 %v585, 64
    %v602 = vpop.permute.xlu0 %601
    %603 = vrot.lane.b32.xlu0 %v586, 64
    %v604 = vpop.permute.xlu0 %603
    %v607 = vmul.f32 %v589, %v602
    %v608 = vmul.f32 %v590, %v604
    %611 = vrot.lane.b32.xlu0 %v607, 32
    %v612 = vpop.permute.xlu0 %611
    %613 = vrot.lane.b32.xlu0 %v608, 32
    %v614 = vpop.permute.xlu0 %613
    %v617 = vadd.f32 %v597, %v612
    %v618 = vadd.f32 %v598, %v614
    %v619 = vtanh.pop %v617
    %v620 = vtanh.pop %v618
    %623 = vrot.lane.b32.xlu0 %v619, 64
    %v624 = vpop.permute.xlu0 %623
    %625 = vrot.lane.b32.xlu0 %v620, 64
    %v626 = vpop.permute.xlu0 %625
    %v629 = vmul.f32 %v589, %v624
    %v630 = vmul.f32 %v590, %v626
    %v633 = vrot.slane %v629, 6
    %v634 = vrot.slane %v630, 5
    %v635 = vsel %vm144, %v634, %v633
    %636 = vrot.lane.b32.xlu0 %v635, 32
    %v637 = vpop.permute.xlu0 %636
    %v638 = vsel %vm71, %v637, 0
    %640 = vmatpush.msra.mxu0 0.0
    %641 = vmatpush.msra.mxu0 0.0
    %642 = vmatpush.msra.mxu0 0.0
    %643 = vmatpush.msra.mxu0 0.0
    %644 = vmatpush.msra.mxu0 0.0
    %645 = vmatpush.msra.mxu0 0.0
    %646 = vmatpush.msra.mxu0 0.0
    %647 = vmatpush.msra.mxu0 0.0
    %648 = vmatpush.msra.mxu0 0.0
    %649 = vmatpush.msra.mxu0 0.0
    %650 = vmatpush.msra.mxu0 0.0
    %651 = vmatpush.msra.mxu0 0.0
    %652 = vmatpush.msra.mxu0 %v36
    %653 = vmatpush.msra.mxu0 %v35
    %654 = vmatpush.msra.mxu0 %v34
    %655 = vmatpush.msra.mxu0 %v33
    %656 = vmatmul.f32.gmra.mxu0 %v638
    %v657 = vpop.f32.mrf.mxu0
    %v658 = vadd.f32 0.0, %v657
    %659 = vdwg.mxu0
    %v661 = vrot.slane %v658, 1
    %v662 = vrot.slane %v658, 2
    %v665 = vadd.f32 %v66, %v661
    %v666 = vadd.f32 %v69, %v662
    %v667 = vtanh.pop %v665
    %v668 = vtanh.pop %v666
    %v669 = vmul.f32 %v667, 0.5
    %v670 = vmul.f32 %v668, 0.5
    %v671 = vadd.f32 %v669, 0.5
    %v672 = vadd.f32 %v670, 0.5
    %v675 = vrot.slane %v617, 7
    %v676 = vrot.slane %v618, 7
    %v679 = vmul.f32 %v671, %v675
    %v680 = vmul.f32 %v672, %v676
    %683 = vrot.lane.b32.xlu0 %v667, 64
    %v684 = vpop.permute.xlu0 %683
    %685 = vrot.lane.b32.xlu0 %v668, 64
    %v686 = vpop.permute.xlu0 %685
    %v689 = vmul.f32 %v671, %v684
    %v690 = vmul.f32 %v672, %v686
    %693 = vrot.lane.b32.xlu0 %v689, 32
    %v694 = vpop.permute.xlu0 %693
    %695 = vrot.lane.b32.xlu0 %v690, 32
    %v696 = vpop.permute.xlu0 %695
    %v699 = vadd.f32 %v679, %v694
    %v700 = vadd.f32 %v680, %v696
    %v701 = vtanh.pop %v699
    %v702 = vtanh.pop %v700
    %705 = vrot.lane.b32.xlu0 %v701, 64
    %v706 = vpop.permute.xlu0 %705
    %707 = vrot.lane.b32.xlu0 %v702, 64
    %v708 = vpop.permute.xlu0 %707
    %v711 = vmul.f32 %v671, %v706
    %v712 = vmul.f32 %v672, %v708
    %v713 = vld [vmem:[%s2] sm:$0xff]
    %v714 = vld [vmem:[%s2 + $0x8] sm:$0xff]
    %v715 = vld [vmem:[%s2 + $0x10] sm:$0xff]
    %v716 = vld [vmem:[%s2 + $0x18] sm:$0xff]
    %v717 = vld [vmem:[%s2 + $0x20] sm:$0x1]
    %v718 = vperm.slane %v717, 0
    %v721 = vrot.slane %v711, 7
    %v722 = vrot.slane %v712, 6
    %v723 = vsel %vm144, %v722, %v721
    %724 = vrot.lane.b32.xlu0 %v723, 32
    %v725 = vpop.permute.xlu0 %724
    %v726 = vsel %vm71, %v725, 0
    %728 = vmatpush.msra.mxu0 0.0
    %729 = vmatpush.msra.mxu0 0.0
    %730 = vmatpush.msra.mxu0 0.0
    %731 = vmatpush.msra.mxu0 0.0
    %732 = vmatpush.msra.mxu0 0.0
    %733 = vmatpush.msra.mxu0 0.0
    %734 = vmatpush.msra.mxu0 0.0
    %735 = vmatpush.msra.mxu0 0.0
    %736 = vmatpush.msra.mxu0 0.0
    %737 = vmatpush.msra.mxu0 0.0
    %738 = vmatpush.msra.mxu0 0.0
    %739 = vmatpush.msra.mxu0 0.0
    %740 = vmatpush.msra.mxu0 %v716
    %741 = vmatpush.msra.mxu0 %v715
    %742 = vmatpush.msra.mxu0 %v714
    %743 = vmatpush.msra.mxu0 %v713
    %744 = vmatmul.f32.gmra.mxu0 %v726
    %v745 = vpop.f32.mrf.mxu0
    %v746 = vadd.f32 %v718, %v745
    %747 = vdwg.mxu0
    %vm748 = vcmask 58368
    %749 = vst.msk [vmem:[#allocation5] sm:$0x3] %vm748, %v746
    // Predicated region
    $region18: #{tpu_custom_call.1} parent=1 // pred_check
      _
    $region19: #{tpu_custom_call.1} parent=1 // pred_check_branch
      %751 = sbr.rel (0) target = $region21
    $region20: #{tpu_custom_call.1} parent=1 // pred_region
      %753 = vsyncadd [#allocation4], 0
      %s755 = sshll.u32 [#allocation5], 4
      %s756 = int_to_ptr.vmem [resolvable:$true] %s755
      %s757 = sshll.u32 %s3, 4
      %s758 = int_to_ptr.hbm [resolvable:$true] %s757
      %760 = dma.vmem_to_hbm [thread:$0]  %s756, 32, %s758, [#allocation4]
    $region21: #{tpu_custom_call.1} parent=1 // pred_fallthru
      _
    // Predicated region
    $region22: #{tpu_custom_call.1} parent=1 // pred_check
      _
    $region23: #{tpu_custom_call.1} parent=1 // pred_check_branch
      %762 = sbr.rel (0) target = $region25
    $region24: #{tpu_custom_call.1} parent=1 // pred_region
      %764 = dma.done [#allocation4], 32
    $region25: #{tpu_custom_call.1} parent=1 // pred_fallthru
      _
    %765 = vsyncpa [#allocation3], 1
    %766 = vsyncpa [#allocation4], 1

</llo_original>
